<compile_context>
chip_gen: v6e
topology: v6e:2x2x1
jax: 0.10.0
libtpu: 0.0.40
codegen_flags: <defaults>
</compile_context>

<pallas_src>
import numpy as np
import jax
import jax.numpy as jnp
from jax.experimental import pallas as pl
from jax.experimental.pallas import tpu as pltpu

# ---------------- model hyper-parameters (small, consistent with the module) ----
VOCAB_SIZE    = 50
EMBEDDING_DIM = 32          # embedding_dim
SENTENCE_LEN  = 16          # sentence_len
NUM_FILTERS   = 16          # num_filters
KERNEL_SIZES  = (3, 4, 5)   # kernel_sizes
NUM_CLASSES   = 4           # num_classes
BATCH         = 2

NK    = len(KERNEL_SIZES)
KMIN  = min(KERNEL_SIZES)
KMAX  = max(KERNEL_SIZES)
NKF   = NUM_FILTERS * NK                 # 48 real conv features
T_MAX = SENTENCE_LEN - KMIN + 1          # 14 = longest valid-conv output length
T_PAD = 16                               # time rows per batch, multiple of 8
FDIM  = 128                              # conv-feature lanes (48 padded to 128)
C_PAD = 128                              # class lanes (4 padded to 128)
CDIM  = 256                              # contraction width (KMAX*V = 250 -> 256)
IDS_PAD_LEN = T_PAD + KMAX - 1           # 20 padded token positions per sentence


def cnn_kernel(win_ref,                  # (B*T_PAD, KMAX) int32 windowed col indices
               wfold_ref,                # (CDIM, FDIM)    emb-folded fused conv weight
               bfold_ref,                # (1, FDIM)       fused conv bias (torch col order)
               mask_ref,                 # (B*T_PAD, FDIM) time/column validity mask {0,1}
               fcw_ref, fcb_ref,         # (FDIM, C_PAD), (1, C_PAD)  (pad bias = -1e30)
               probs_ref, feat_ref):     # outputs: (B, C_PAD), (B, FDIM)
    R, KW = win_ref.shape                # (32, 5)
    cdim  = wfold_ref.shape[0]           # 256
    fd    = wfold_ref.shape[1]           # 128
    B     = feat_ref.shape[0]
    T     = R // B                       # T_PAD

    # ---- windowed one-hot over token ids: 5 lane-broadcast compares, no relayout
    win = win_ref[...]                                           # (R, KMAX) int32
    col = jax.lax.broadcasted_iota(jnp.int32, (R, cdim), 1)      # (R, CDIM)
    onehot = (col == win[:, 0:1]).astype(jnp.float32)
    for j in range(1, KW):                                       # static unroll
        onehot = onehot + (col == win[:, j:j + 1]).astype(jnp.float32)

    # ---- single fused embedding+conv matmul, bias, ReLU, validity mask ---------
    conv = jnp.dot(onehot, wfold_ref[...],
                   preferred_element_type=jnp.float32)           # (R, FDIM)
    conv = jnp.maximum(conv + bfold_ref[...], 0.0) * mask_ref[...]

    # ---- maxpool over time (tile-aligned sublane split, then axis-1 reduce) ----
    feat = jnp.max(conv.reshape(B, T, fd), axis=1)               # (B, FDIM)
    feat_ref[...] = feat

    # Dropout(p=0.5) is identity in eval mode.  FC + softmax(dim=1); pad classes
    # carry a -1e30 bias so exp() underflows to exactly 0 and the sum is exact.
    logits = jnp.dot(feat, fcw_ref[...],
                     preferred_element_type=jnp.float32) + fcb_ref[...]
    z = logits - jnp.max(logits, axis=1, keepdims=True)
    e = jnp.exp(z)
    probs_ref[...] = e / jnp.sum(e, axis=1, keepdims=True)


def _forward_impl(x_ids, params):
    """x_ids: (B, L) int32 token ids -> (probs (B,C), features (B,3F))."""
    B, L = x_ids.shape
    # Pure index plumbing in XLA (free): pad time and build windowed column ids
    # win_cols[b*T_PAD + t, j] = j*V + ids_pad[b, t+j].  Out-of-range taps read
    # padded id 0; they only touch masked output rows, so they are harmless.
    ids_pad = jnp.pad(x_ids, ((0, 0), (0, IDS_PAD_LEN - L)))
    win = jnp.stack([ids_pad[:, j:j + T_PAD] + j * VOCAB_SIZE
                     for j in range(KMAX)], axis=-1)             # (B, T_PAD, KMAX)
    win_cols = win.reshape(B * T_PAD, KMAX).astype(jnp.int32)

    vmem = pl.BlockSpec(memory_space=pltpu.MemorySpace.VMEM)
    probs_pad, feat_pad = pl.pallas_call(
        cnn_kernel,
        in_specs=[vmem] * 6,
        out_specs=(vmem, vmem),
        out_shape=(
            jax.ShapeDtypeStruct((B, C_PAD), jnp.float32),
            jax.ShapeDtypeStruct((B, FDIM), jnp.float32),
        ),
    )(win_cols,
      params['w_fold'], params['b_fold'], params['mask'],
      params['fc_w_pad'], params['fc_b_pad'])

    # Slice the lane-dense slabs back to the module's shapes.
    return probs_pad[:, :NUM_CLASSES], feat_pad[:, :NKF]


cnn_forward = jax.jit(_forward_impl)


def init_params(key):
    """Deterministic init matching the PyTorch module's shapes, plus host-side
    folding of the embedding into the conv weights and lane padding."""
    keys = jax.random.split(key, 10)
    params = {}
    # "pretrained" embedding table (vocab_size, embedding_dim)
    emb = 0.1 * jax.random.normal(keys[0], (VOCAB_SIZE, EMBEDDING_DIM), jnp.float32)
    params['emb'] = emb
    emb_np = np.asarray(emb)

    w_fold = np.zeros((CDIM, FDIM), np.float32)          # (256, 128)
    b_fold = np.zeros((1, FDIM), np.float32)
    mask1  = np.zeros((T_PAD, FDIM), np.float32)
    for i, k in enumerate(KERNEL_SIZES):
        # PyTorch Conv1d weight (F, E, k) and bias (F,)
        w_torch = 0.1 * jax.random.normal(
            keys[1 + 2 * i], (NUM_FILTERS, EMBEDDING_DIM, k), jnp.float32)
        b_torch = 0.1 * jax.random.normal(
            keys[2 + 2 * i], (1, NUM_FILTERS), jnp.float32)
        # tap-major (k*E, F): row j*E+e, col f == w_torch[f, e, j]
        w_kEF = jnp.transpose(w_torch, (2, 1, 0)).reshape(
            k * EMBEDDING_DIM, NUM_FILTERS)
        params[f'w{k}'] = w_kEF            # reference path only
        params[f'b{k}'] = b_torch          # (1, F), reference only
        w_kEF_np = np.asarray(w_kEF)
        # Fused columns in torch.cat(dim=2).view order: col = f*NK + i
        cols = np.arange(NUM_FILTERS) * NK + i
        for j in range(k):
            # fold embedding: (V, E) @ (E, F) -> (V, F) placed at rows [j*V, (j+1)*V)
            blk = emb_np @ w_kEF_np[j * EMBEDDING_DIM:(j + 1) * EMBEDDING_DIM, :]
            w_fold[j * VOCAB_SIZE:(j + 1) * VOCAB_SIZE, cols] = blk
        b_fold[0, cols] = np.asarray(b_torch[0])
        mask1[: SENTENCE_LEN - k + 1, cols] = 1.0        # valid time steps only
    params['w_fold'] = jnp.asarray(w_fold)                       # (CDIM, FDIM)
    params['b_fold'] = jnp.asarray(b_fold)                       # (1, FDIM)
    params['mask']   = jnp.asarray(np.tile(mask1, (BATCH, 1)))   # (B*T_PAD, FDIM)

    # Linear: PyTorch weight (C, 3F); pass transposed and lane-padded.
    fc_w_torch = 0.1 * jax.random.normal(keys[7], (NUM_CLASSES, NKF), jnp.float32)
    fc_b = 0.1 * jax.random.normal(keys[8], (1, NUM_CLASSES), jnp.float32)
    params['fc_w'] = fc_w_torch.T          # (48, 4), reference only
    params['fc_b'] = fc_b                  # (1, 4),  reference only
    fc_w_pad = np.zeros((FDIM, C_PAD), np.float32)
    fc_w_pad[:NKF, :NUM_CLASSES] = np.asarray(fc_w_torch.T)
    fc_b_pad = np.full((1, C_PAD), -1e30, np.float32)    # pad classes -> prob 0
    fc_b_pad[0, :NUM_CLASSES] = np.asarray(fc_b[0])
    params['fc_w_pad'] = jnp.asarray(fc_w_pad)
    params['fc_b_pad'] = jnp.asarray(fc_b_pad)
    return params


def reference_forward(x_ids, params):
    """Plain-JAX reference (gather embedding + per-tap convs) for correctness."""
    x_emb = params['emb'][x_ids]                     # (B, L, E)
    B, L, E = x_emb.shape
    pooled = []
    for k in KERNEL_SIZES:
        T = L - k + 1
        w = params[f'w{k}']
        acc = jnp.zeros((B, T, NUM_FILTERS), jnp.float32)
        for j in range(k):
            acc = acc + jnp.einsum('bte,ef->btf',
                                   x_emb[:, j:j + T, :],
                                   w[j * E:(j + 1) * E, :])
        acc = jnp.maximum(acc + params[f'b{k}'][None, :, :], 0.0)
        pooled.append(jnp.max(acc, axis=1))
    # torch.cat(dim=2).view(B, -1): filter-major, kernel-minor
    feat = jnp.stack(pooled, axis=-1).reshape(B, -1)
    logits = feat @ params['fc_w'] + params['fc_b']
    return jax.nn.softmax(logits, axis=1), feat


if __name__ == "__main__":
    key = jax.random.PRNGKey(0)
    k_param, k_ids = jax.random.split(key)
    params = init_params(k_param)

    # Token ids (B, L) int32 -- the module's input.
    x_ids = jax.random.randint(k_ids, (BATCH, SENTENCE_LEN), 0, VOCAB_SIZE,
                               dtype=jnp.int32)

    probs, feats = cnn_forward(x_ids, params)
    probs = jax.block_until_ready(probs)
    feats = jax.block_until_ready(feats)

    ref_probs, ref_feats = reference_forward(x_ids, params)
    assert probs.shape == (BATCH, NUM_CLASSES)
    assert feats.shape == (BATCH, NKF)
    assert jnp.allclose(feats, ref_feats, atol=1e-5), "features mismatch"
    assert jnp.allclose(probs, ref_probs, atol=1e-5), "probs mismatch"
    assert jnp.allclose(jnp.sum(probs, axis=1), 1.0, atol=1e-5)

    print("KERNEL_OK")
</pallas_src>

<mosaic_0001>
module attributes {stable_mosaic.version = 11 : i64} {
  func.func @cnn_kernel(%arg0: memref<32x5xi32, #tpu.memory_space<vmem>>, %arg1: memref<256x128xf32, #tpu.memory_space<vmem>>, %arg2: memref<1x128xf32, #tpu.memory_space<vmem>>, %arg3: memref<32x128xf32, #tpu.memory_space<vmem>>, %arg4: memref<128x128xf32, #tpu.memory_space<vmem>>, %arg5: memref<1x128xf32, #tpu.memory_space<vmem>>, %arg6: memref<2x128xf32, #tpu.memory_space<vmem>>, %arg7: memref<2x128xf32, #tpu.memory_space<vmem>>) attributes {dimension_semantics = [], scalar_prefetch = 0 : i64, scratch_operands = 0 : i64, tpu.core_type = #tpu.core_type<tc>} {
    %c0 = arith.constant 0 : index
    %c0_0 = arith.constant 0 : index
    %0 = vector.load %arg0[%c0, %c0_0] : memref<32x5xi32, #tpu.memory_space<vmem>>, vector<32x5xi32>
    %1 = tpu.iota {dimensions = array<i32: 1>} : vector<32x256xi32>
    %2 = vector.extract_strided_slice %0 {offsets = [0, 0], sizes = [32, 1], strides = [1, 1]} : vector<32x5xi32> to vector<32x1xi32>
    %3 = vector.broadcast %2 : vector<32x1xi32> to vector<32x256xi32>
    %4 = arith.cmpi eq, %1, %3 : vector<32x256xi32>
    %5 = arith.extui %4 : vector<32x256xi1> to vector<32x256xi32>
    %6 = arith.sitofp %5 : vector<32x256xi32> to vector<32x256xf32>
    %7 = vector.extract_strided_slice %0 {offsets = [0, 1], sizes = [32, 1], strides = [1, 1]} : vector<32x5xi32> to vector<32x1xi32>
    %8 = vector.broadcast %7 : vector<32x1xi32> to vector<32x256xi32>
    %9 = arith.cmpi eq, %1, %8 : vector<32x256xi32>
    %10 = arith.extui %9 : vector<32x256xi1> to vector<32x256xi32>
    %11 = arith.sitofp %10 : vector<32x256xi32> to vector<32x256xf32>
    %12 = arith.addf %6, %11 : vector<32x256xf32>
    %13 = vector.extract_strided_slice %0 {offsets = [0, 2], sizes = [32, 1], strides = [1, 1]} : vector<32x5xi32> to vector<32x1xi32>
    %14 = vector.broadcast %13 : vector<32x1xi32> to vector<32x256xi32>
    %15 = arith.cmpi eq, %1, %14 : vector<32x256xi32>
    %16 = arith.extui %15 : vector<32x256xi1> to vector<32x256xi32>
    %17 = arith.sitofp %16 : vector<32x256xi32> to vector<32x256xf32>
    %18 = arith.addf %12, %17 : vector<32x256xf32>
    %19 = vector.extract_strided_slice %0 {offsets = [0, 3], sizes = [32, 1], strides = [1, 1]} : vector<32x5xi32> to vector<32x1xi32>
    %20 = vector.broadcast %19 : vector<32x1xi32> to vector<32x256xi32>
    %21 = arith.cmpi eq, %1, %20 : vector<32x256xi32>
    %22 = arith.extui %21 : vector<32x256xi1> to vector<32x256xi32>
    %23 = arith.sitofp %22 : vector<32x256xi32> to vector<32x256xf32>
    %24 = arith.addf %18, %23 : vector<32x256xf32>
    %25 = vector.extract_strided_slice %0 {offsets = [0, 4], sizes = [32, 1], strides = [1, 1]} : vector<32x5xi32> to vector<32x1xi32>
    %26 = vector.broadcast %25 : vector<32x1xi32> to vector<32x256xi32>
    %27 = arith.cmpi eq, %1, %26 : vector<32x256xi32>
    %28 = arith.extui %27 : vector<32x256xi1> to vector<32x256xi32>
    %29 = arith.sitofp %28 : vector<32x256xi32> to vector<32x256xf32>
    %30 = arith.addf %24, %29 : vector<32x256xf32>
    %c0_1 = arith.constant 0 : index
    %c0_2 = arith.constant 0 : index
    %31 = vector.load %arg1[%c0_1, %c0_2] : memref<256x128xf32, #tpu.memory_space<vmem>>, vector<256x128xf32>
    %cst = arith.constant dense<0.000000e+00> : vector<32x128xf32>
    %32 = tpu.matmul %30, %31, %cst {dimension_numbers = #tpu.dot_dimension_numbers<[1], [0], [0], [1], [0, 0, 1, 1], [], []>} : vector<32x256xf32>, vector<256x128xf32>, vector<32x128xf32> -> vector<32x128xf32>
    %c0_3 = arith.constant 0 : index
    %c0_4 = arith.constant 0 : index
    %33 = vector.load %arg2[%c0_3, %c0_4] : memref<1x128xf32, #tpu.memory_space<vmem>>, vector<1x128xf32>
    %34 = vector.broadcast %33 : vector<1x128xf32> to vector<32x128xf32>
    %35 = arith.addf %32, %34 : vector<32x128xf32>
    %cst_5 = arith.constant 0.000000e+00 : f32
    %36 = vector.broadcast %cst_5 : f32 to vector<32x128xf32>
    %37 = arith.maximumf %35, %36 : vector<32x128xf32>
    %c0_6 = arith.constant 0 : index
    %c0_7 = arith.constant 0 : index
    %38 = vector.load %arg3[%c0_6, %c0_7] : memref<32x128xf32, #tpu.memory_space<vmem>>, vector<32x128xf32>
    %39 = arith.mulf %37, %38 : vector<32x128xf32>
    %40 = vector.shape_cast %39 : vector<32x128xf32> to vector<2x16x128xf32>
    %cst_8 = arith.constant dense<0xFF800000> : vector<2x128xf32>
    %41 = vector.multi_reduction <maximumf>, %40, %cst_8 [1] : vector<2x16x128xf32> to vector<2x128xf32>
    %c0_9 = arith.constant 0 : index
    %c0_10 = arith.constant 0 : index
    %42 = vector.load %arg7[%c0_9, %c0_10] : memref<2x128xf32, #tpu.memory_space<vmem>>, vector<2x128xf32>
    tpu.vector_store %arg7[%c0_9, %c0_10], %41 {strides = array<i32>} : memref<2x128xf32, #tpu.memory_space<vmem>>, vector<2x128xf32>,
    %c0_11 = arith.constant 0 : index
    %c0_12 = arith.constant 0 : index
    %43 = vector.load %arg4[%c0_11, %c0_12] : memref<128x128xf32, #tpu.memory_space<vmem>>, vector<128x128xf32>
    %cst_13 = arith.constant dense<0.000000e+00> : vector<2x128xf32>
    %44 = tpu.matmul %41, %43, %cst_13 {dimension_numbers = #tpu.dot_dimension_numbers<[1], [0], [0], [1], [0, 0, 1, 1], [], []>} : vector<2x128xf32>, vector<128x128xf32>, vector<2x128xf32> -> vector<2x128xf32>
    %c0_14 = arith.constant 0 : index
    %c0_15 = arith.constant 0 : index
    %45 = vector.load %arg5[%c0_14, %c0_15] : memref<1x128xf32, #tpu.memory_space<vmem>>, vector<1x128xf32>
    %46 = vector.broadcast %45 : vector<1x128xf32> to vector<2x128xf32>
    %47 = arith.addf %44, %46 : vector<2x128xf32>
    %cst_16 = arith.constant dense<0xFF800000> : vector<2xf32>
    %48 = vector.multi_reduction <maximumf>, %47, %cst_16 [1] : vector<2x128xf32> to vector<2xf32>
    %49 = vector.shape_cast %48 : vector<2xf32> to vector<2x1xf32>
    %50 = vector.broadcast %49 : vector<2x1xf32> to vector<2x128xf32>
    %51 = arith.subf %47, %50 : vector<2x128xf32>
    %52 = math.exp %51 : vector<2x128xf32>
    %cst_17 = arith.constant dense<0.000000e+00> : vector<2xf32>
    %53 = vector.multi_reduction <add>, %52, %cst_17 [1] : vector<2x128xf32> to vector<2xf32>
    %54 = vector.shape_cast %53 : vector<2xf32> to vector<2x1xf32>
    %55 = vector.broadcast %54 : vector<2x1xf32> to vector<2x128xf32>
    %56 = arith.divf %52, %55 : vector<2x128xf32>
    %c0_18 = arith.constant 0 : index
    %c0_19 = arith.constant 0 : index
    %57 = vector.load %arg6[%c0_18, %c0_19] : memref<2x128xf32, #tpu.memory_space<vmem>>, vector<2x128xf32>
    tpu.vector_store %arg6[%c0_18, %c0_19], %56 {strides = array<i32>} : memref<2x128xf32, #tpu.memory_space<vmem>>, vector<2x128xf32>,
    return
  }
}

</mosaic_0001>

<llo_original>
// kernel: _forward_impl.1
$region0: #{_forward_impl.1}
  #allocation0 [shape = 'u32[]', space=smem, size = 0x4, offset = 0x4, fixed_abs, tag = 'smem constant byte address 0x4 - core index']
  #allocation1 [shape = 'u32[144,128]{1,0:T(1,128)}', space=vmem, size = 0x12000, scoped, tag = 'internal scratch']
  %s0 = inlined_call_operand.vmem [shape: s32[32,5], index: 0, kind: input, shape index: {}]
  %s1 = inlined_call_operand.hbm [shape: f32[256,128], index: 1, kind: input, shape index: {}]
  %s2 = inlined_call_operand.vmem [shape: f32[1,128], index: 2, kind: input, shape index: {}]
  %s3 = inlined_call_operand.vmem [shape: f32[32,128], index: 3, kind: input, shape index: {}]
  %s4 = inlined_call_operand.hbm [shape: f32[128,128], index: 4, kind: input, shape index: {}]
  %s5 = inlined_call_operand.vmem [shape: f32[1,128], index: 5, kind: input, shape index: {}]
  %s6 = inlined_call_operand.hbm [shape: f32[2,128], index: 6, kind: output, shape index: {0}]
  %s7 = inlined_call_operand.hbm [shape: f32[2,128], index: 7, kind: output, shape index: {1}]
  %8 = xla_tuple %s6, %s7
  %s9 = sld [smem:[#allocation0]]
  $region50: #{_forward_impl.1} parent=0
    _
  %s11 = ssub.s32 1, %s9
  %s12 = scalar_select 0, %s11, %s9
  $region1: #{_forward_impl.1} parent=0
    #allocation2 [shape = 'u8[131072]{0}', space=vmem, size = 0x20000, scoped, tag = 'input window, operand 1, single buffered']
    #allocation3 [shape = 's32[1]{0}', space=sflag, size = 0x4, scoped, tag = 'scoped memory for _forward_impl.1']
    #allocation4 [shape = 's32[1]{0}', space=sflag, size = 0x4, scoped, tag = 'scoped memory for _forward_impl.1']
    #allocation5 [shape = 'u8[65536]{0}', space=vmem, size = 0x10000, scoped, tag = 'input window, operand 4, single buffered']
    #allocation6 [shape = 's32[1]{0}', space=sflag, size = 0x4, scoped, tag = 'scoped memory for _forward_impl.1']
    #allocation7 [shape = 'u8[1024]{0}', space=vmem, size = 0x400, scoped, tag = 'output window, operand 0, single buffered']
    #allocation8 [shape = 'u8[1024]{0}', space=vmem, size = 0x400, scoped, tag = 'output window, operand 1, single buffered']
    #allocation9 [shape = 's32[1]{0}', space=sflag, size = 0x4, scoped, tag = 'scoped memory for _forward_impl.1']
    %13 = vsyncpa [#allocation3], 0
    %14 = vsyncpa [#allocation6], 0
    %15 = vsyncpa [#allocation4], 0
    %16 = vsyncpa [#allocation9], 0
    // Predicated region
    $region2: #{_forward_impl.1} parent=1 // pred_check
      _
    $region3: #{_forward_impl.1} parent=1 // pred_check_branch
      %18 = sbr.rel (0) target = $region5
    $region4: #{_forward_impl.1} parent=1 // pred_region
      _
    $region5: #{_forward_impl.1} parent=1 // pred_fallthru
      _
    // Predicated region
    $region6: #{_forward_impl.1} parent=1 // pred_check
      _
    $region7: #{_forward_impl.1} parent=1 // pred_check_branch
      %20 = sbr.rel (0) target = $region9
    $region8: #{_forward_impl.1} parent=1 // pred_region
      %s22 = ssub.s32 4096, 4096
      %23 = vsyncadd [#allocation3], %s22
      %s24 = sshll.u32 [#allocation2], 4
      %s25 = int_to_ptr.vmem [resolvable:$true] %s24
      %30 = dma.hbm_to_vmem [thread:$0]  %s1, 4096, %s25, [#allocation3], 128, 128, 8
    $region9: #{_forward_impl.1} parent=1 // pred_fallthru
      _
    // Predicated region
    $region10: #{_forward_impl.1} parent=1 // pred_check
      _
    $region11: #{_forward_impl.1} parent=1 // pred_check_branch
      %32 = sbr.rel (0) target = $region13
    $region12: #{_forward_impl.1} parent=1 // pred_region
      _
    $region13: #{_forward_impl.1} parent=1 // pred_fallthru
      _
    // Predicated region
    $region14: #{_forward_impl.1} parent=1 // pred_check
      _
    $region15: #{_forward_impl.1} parent=1 // pred_check_branch
      %34 = sbr.rel (0) target = $region17
    $region16: #{_forward_impl.1} parent=1 // pred_region
      _
    $region17: #{_forward_impl.1} parent=1 // pred_fallthru
      _
    // Predicated region
    $region18: #{_forward_impl.1} parent=1 // pred_check
      _
    $region19: #{_forward_impl.1} parent=1 // pred_check_branch
      %36 = sbr.rel (0) target = $region21
    $region20: #{_forward_impl.1} parent=1 // pred_region
      %s38 = ssub.s32 2048, 2048
      %39 = vsyncadd [#allocation6], %s38
      %s40 = sshll.u32 [#allocation5], 4
      %s41 = int_to_ptr.vmem [resolvable:$true] %s40
      %46 = dma.hbm_to_vmem [thread:$0]  %s4, 2048, %s41, [#allocation6], 128, 128, 8
    $region21: #{_forward_impl.1} parent=1 // pred_fallthru
      _
    // Predicated region
    $region22: #{_forward_impl.1} parent=1 // pred_check
      _
    $region23: #{_forward_impl.1} parent=1 // pred_check_branch
      %48 = sbr.rel (0) target = $region25
    $region24: #{_forward_impl.1} parent=1 // pred_region
      _
    $region25: #{_forward_impl.1} parent=1 // pred_fallthru
      _
    // Predicated region
    $region26: #{_forward_impl.1} parent=1 // pred_check
      _
    $region27: #{_forward_impl.1} parent=1 // pred_check_branch
      %50 = sbr.rel (0) target = $region29
    $region28: #{_forward_impl.1} parent=1 // pred_region
      %51 = dma.done [#allocation3], 4096
    $region29: #{_forward_impl.1} parent=1 // pred_fallthru
      _
    // Predicated region
    $region30: #{_forward_impl.1} parent=1 // pred_check
      _
    $region31: #{_forward_impl.1} parent=1 // pred_check_branch
      %53 = sbr.rel (0) target = $region33
    $region32: #{_forward_impl.1} parent=1 // pred_region
      %54 = dma.done [#allocation6], 2048
    $region33: #{_forward_impl.1} parent=1 // pred_fallthru
      _
    %v55 = vld [vmem:[%s0] sm:$0xff]
    %v56 = vld [vmem:[%s0 + $0x8] sm:$0xff]
    %v57 = vld [vmem:[%s0 + $0x10] sm:$0xff]
    %v58 = vld [vmem:[%s0 + $0x18] sm:$0xff]
    %v59 = vlaneseq
    %v60 = vand.u32 %v59, 127
    %v61 = vadd.s32 %v60, 128
    %62 = vset.pattern.permute.xlu0 0
    %63 = vperm.xlu0 %62, %v55
    %v64 = vpop.permute.xlu0 %63
    %65 = vset.pattern.permute.xlu0 0
    %66 = vperm.xlu0 %65, %v56
    %v67 = vpop.permute.xlu0 %66
    %68 = vset.pattern.permute.xlu0 0
    %69 = vperm.xlu0 %68, %v57
    %v70 = vpop.permute.xlu0 %69
    %71 = vset.pattern.permute.xlu0 0
    %72 = vperm.xlu0 %71, %v58
    %v73 = vpop.permute.xlu0 %72
    %vm74 = vcmp.eq.s32.totalorder %v60, %v64
    %vm75 = vcmp.eq.s32.totalorder %v61, %v64
    %vm76 = vcmp.eq.s32.totalorder %v60, %v67
    %vm77 = vcmp.eq.s32.totalorder %v61, %v67
    %vm78 = vcmp.eq.s32.totalorder %v60, %v70
    %vm79 = vcmp.eq.s32.totalorder %v61, %v70
    %vm80 = vcmp.eq.s32.totalorder %v60, %v73
    %vm81 = vcmp.eq.s32.totalorder %v61, %v73
    %v82 = vsel %vm74, 1, 0
    %v83 = vsel %vm75, 1, 0
    %v84 = vsel %vm76, 1, 0
    %v85 = vsel %vm77, 1, 0
    %v86 = vsel %vm78, 1, 0
    %v87 = vsel %vm79, 1, 0
    %v88 = vsel %vm80, 1, 0
    %v89 = vsel %vm81, 1, 0
    %v90 = vcvt.s32.f32 %v82
    %v91 = vcvt.s32.f32 %v83
    %v92 = vcvt.s32.f32 %v84
    %v93 = vcvt.s32.f32 %v85
    %v94 = vcvt.s32.f32 %v86
    %v95 = vcvt.s32.f32 %v87
    %v96 = vcvt.s32.f32 %v88
    %v97 = vcvt.s32.f32 %v89
    %98 = vset.pattern.permute.xlu0 1
    %99 = vperm.xlu0 %98, %v55
    %v100 = vpop.permute.xlu0 %99
    %101 = vset.pattern.permute.xlu0 1
    %102 = vperm.xlu0 %101, %v56
    %v103 = vpop.permute.xlu0 %102
    %104 = vset.pattern.permute.xlu0 1
    %105 = vperm.xlu0 %104, %v57
    %v106 = vpop.permute.xlu0 %105
    %107 = vset.pattern.permute.xlu0 1
    %108 = vperm.xlu0 %107, %v58
    %v109 = vpop.permute.xlu0 %108
    %vm110 = vcmp.eq.s32.totalorder %v60, %v100
    %vm111 = vcmp.eq.s32.totalorder %v61, %v100
    %vm112 = vcmp.eq.s32.totalorder %v60, %v103
    %vm113 = vcmp.eq.s32.totalorder %v61, %v103
    %vm114 = vcmp.eq.s32.totalorder %v60, %v106
    %vm115 = vcmp.eq.s32.totalorder %v61, %v106
    %vm116 = vcmp.eq.s32.totalorder %v60, %v109
    %vm117 = vcmp.eq.s32.totalorder %v61, %v109
    %v118 = vsel %vm110, 1, 0
    %v119 = vsel %vm111, 1, 0
    %v120 = vsel %vm112, 1, 0
    %v121 = vsel %vm113, 1, 0
    %v122 = vsel %vm114, 1, 0
    %v123 = vsel %vm115, 1, 0
    %v124 = vsel %vm116, 1, 0
    %v125 = vsel %vm117, 1, 0
    %v126 = vcvt.s32.f32 %v118
    %v127 = vcvt.s32.f32 %v119
    %v128 = vcvt.s32.f32 %v120
    %v129 = vcvt.s32.f32 %v121
    %v130 = vcvt.s32.f32 %v122
    %v131 = vcvt.s32.f32 %v123
    %v132 = vcvt.s32.f32 %v124
    %v133 = vcvt.s32.f32 %v125
    %v134 = vadd.f32 %v90, %v126
    %v135 = vadd.f32 %v91, %v127
    %v136 = vadd.f32 %v92, %v128
    %v137 = vadd.f32 %v93, %v129
    %v138 = vadd.f32 %v94, %v130
    %v139 = vadd.f32 %v95, %v131
    %v140 = vadd.f32 %v96, %v132
    %v141 = vadd.f32 %v97, %v133
    %142 = vset.pattern.permute.xlu0 2
    %143 = vperm.xlu0 %142, %v55
    %v144 = vpop.permute.xlu0 %143
    %145 = vset.pattern.permute.xlu0 2
    %146 = vperm.xlu0 %145, %v56
    %v147 = vpop.permute.xlu0 %146
    %148 = vset.pattern.permute.xlu0 2
    %149 = vperm.xlu0 %148, %v57
    %v150 = vpop.permute.xlu0 %149
    %151 = vset.pattern.permute.xlu0 2
    %152 = vperm.xlu0 %151, %v58
    %v153 = vpop.permute.xlu0 %152
    %vm154 = vcmp.eq.s32.totalorder %v60, %v144
    %vm155 = vcmp.eq.s32.totalorder %v61, %v144
    %vm156 = vcmp.eq.s32.totalorder %v60, %v147
    %vm157 = vcmp.eq.s32.totalorder %v61, %v147
    %vm158 = vcmp.eq.s32.totalorder %v60, %v150
    %vm159 = vcmp.eq.s32.totalorder %v61, %v150
    %vm160 = vcmp.eq.s32.totalorder %v60, %v153
    %vm161 = vcmp.eq.s32.totalorder %v61, %v153
    %v162 = vsel %vm154, 1, 0
    %v163 = vsel %vm155, 1, 0
    %v164 = vsel %vm156, 1, 0
    %v165 = vsel %vm157, 1, 0
    %v166 = vsel %vm158, 1, 0
    %v167 = vsel %vm159, 1, 0
    %v168 = vsel %vm160, 1, 0
    %v169 = vsel %vm161, 1, 0
    %v170 = vcvt.s32.f32 %v162
    %v171 = vcvt.s32.f32 %v163
    %v172 = vcvt.s32.f32 %v164
    %v173 = vcvt.s32.f32 %v165
    %v174 = vcvt.s32.f32 %v166
    %v175 = vcvt.s32.f32 %v167
    %v176 = vcvt.s32.f32 %v168
    %v177 = vcvt.s32.f32 %v169
    %v178 = vadd.f32 %v134, %v170
    %v179 = vadd.f32 %v135, %v171
    %v180 = vadd.f32 %v136, %v172
    %v181 = vadd.f32 %v137, %v173
    %v182 = vadd.f32 %v138, %v174
    %v183 = vadd.f32 %v139, %v175
    %v184 = vadd.f32 %v140, %v176
    %v185 = vadd.f32 %v141, %v177
    %186 = vset.pattern.permute.xlu0 3
    %187 = vperm.xlu0 %186, %v55
    %v188 = vpop.permute.xlu0 %187
    %189 = vset.pattern.permute.xlu0 3
    %190 = vperm.xlu0 %189, %v56
    %v191 = vpop.permute.xlu0 %190
    %192 = vset.pattern.permute.xlu0 3
    %193 = vperm.xlu0 %192, %v57
    %v194 = vpop.permute.xlu0 %193
    %195 = vset.pattern.permute.xlu0 3
    %196 = vperm.xlu0 %195, %v58
    %v197 = vpop.permute.xlu0 %196
    %vm198 = vcmp.eq.s32.totalorder %v60, %v188
    %vm199 = vcmp.eq.s32.totalorder %v61, %v188
    %vm200 = vcmp.eq.s32.totalorder %v60, %v191
    %vm201 = vcmp.eq.s32.totalorder %v61, %v191
    %vm202 = vcmp.eq.s32.totalorder %v60, %v194
    %vm203 = vcmp.eq.s32.totalorder %v61, %v194
    %vm204 = vcmp.eq.s32.totalorder %v60, %v197
    %vm205 = vcmp.eq.s32.totalorder %v61, %v197
    %v206 = vsel %vm198, 1, 0
    %v207 = vsel %vm199, 1, 0
    %v208 = vsel %vm200, 1, 0
    %v209 = vsel %vm201, 1, 0
    %v210 = vsel %vm202, 1, 0
    %v211 = vsel %vm203, 1, 0
    %v212 = vsel %vm204, 1, 0
    %v213 = vsel %vm205, 1, 0
    %v214 = vcvt.s32.f32 %v206
    %v215 = vcvt.s32.f32 %v207
    %v216 = vcvt.s32.f32 %v208
    %v217 = vcvt.s32.f32 %v209
    %v218 = vcvt.s32.f32 %v210
    %v219 = vcvt.s32.f32 %v211
    %v220 = vcvt.s32.f32 %v212
    %v221 = vcvt.s32.f32 %v213
    %v222 = vadd.f32 %v178, %v214
    %v223 = vadd.f32 %v179, %v215
    %v224 = vadd.f32 %v180, %v216
    %v225 = vadd.f32 %v181, %v217
    %v226 = vadd.f32 %v182, %v218
    %v227 = vadd.f32 %v183, %v219
    %v228 = vadd.f32 %v184, %v220
    %v229 = vadd.f32 %v185, %v221
    %230 = vset.pattern.permute.xlu0 4
    %231 = vperm.xlu0 %230, %v55
    %v232 = vpop.permute.xlu0 %231
    %233 = vset.pattern.permute.xlu0 4
    %234 = vperm.xlu0 %233, %v56
    %v235 = vpop.permute.xlu0 %234
    %236 = vset.pattern.permute.xlu0 4
    %237 = vperm.xlu0 %236, %v57
    %v238 = vpop.permute.xlu0 %237
    %239 = vset.pattern.permute.xlu0 4
    %240 = vperm.xlu0 %239, %v58
    %v241 = vpop.permute.xlu0 %240
    %vm242 = vcmp.eq.s32.totalorder %v60, %v232
    %vm243 = vcmp.eq.s32.totalorder %v61, %v232
    %vm244 = vcmp.eq.s32.totalorder %v60, %v235
    %vm245 = vcmp.eq.s32.totalorder %v61, %v235
    %vm246 = vcmp.eq.s32.totalorder %v60, %v238
    %vm247 = vcmp.eq.s32.totalorder %v61, %v238
    %vm248 = vcmp.eq.s32.totalorder %v60, %v241
    %vm249 = vcmp.eq.s32.totalorder %v61, %v241
    %v250 = vsel %vm242, 1, 0
    %v251 = vsel %vm243, 1, 0
    %v252 = vsel %vm244, 1, 0
    %v253 = vsel %vm245, 1, 0
    %v254 = vsel %vm246, 1, 0
    %v255 = vsel %vm247, 1, 0
    %v256 = vsel %vm248, 1, 0
    %v257 = vsel %vm249, 1, 0
    %v258 = vcvt.s32.f32 %v250
    %v259 = vcvt.s32.f32 %v251
    %v260 = vcvt.s32.f32 %v252
    %v261 = vcvt.s32.f32 %v253
    %v262 = vcvt.s32.f32 %v254
    %v263 = vcvt.s32.f32 %v255
    %v264 = vcvt.s32.f32 %v256
    %v265 = vcvt.s32.f32 %v257
    %v266 = vadd.f32 %v222, %v258
    %v267 = vadd.f32 %v223, %v259
    %v268 = vadd.f32 %v224, %v260
    %v269 = vadd.f32 %v225, %v261
    %v270 = vadd.f32 %v226, %v262
    %v271 = vadd.f32 %v227, %v263
    %v272 = vadd.f32 %v228, %v264
    %v273 = vadd.f32 %v229, %v265
    %v274 = vld [vmem:[#allocation2] sm:$0xff]
    %v275 = vld [vmem:[#allocation2 + $0x8] sm:$0xff]
    %v276 = vld [vmem:[#allocation2 + $0x10] sm:$0xff]
    %v277 = vld [vmem:[#allocation2 + $0x18] sm:$0xff]
    %v278 = vld [vmem:[#allocation2 + $0x20] sm:$0xff]
    %v279 = vld [vmem:[#allocation2 + $0x28] sm:$0xff]
    %v280 = vld [vmem:[#allocation2 + $0x30] sm:$0xff]
    %v281 = vld [vmem:[#allocation2 + $0x38] sm:$0xff]
    %v282 = vld [vmem:[#allocation2 + $0x40] sm:$0xff]
    %v283 = vld [vmem:[#allocation2 + $0x48] sm:$0xff]
    %v284 = vld [vmem:[#allocation2 + $0x50] sm:$0xff]
    %v285 = vld [vmem:[#allocation2 + $0x58] sm:$0xff]
    %v286 = vld [vmem:[#allocation2 + $0x60] sm:$0xff]
    %v287 = vld [vmem:[#allocation2 + $0x68] sm:$0xff]
    %v288 = vld [vmem:[#allocation2 + $0x70] sm:$0xff]
    %v289 = vld [vmem:[#allocation2 + $0x78] sm:$0xff]
    %v290 = vld [vmem:[#allocation2 + $0x80] sm:$0xff]
    %v291 = vld [vmem:[#allocation2 + $0x88] sm:$0xff]
    %v292 = vld [vmem:[#allocation2 + $0x90] sm:$0xff]
    %v293 = vld [vmem:[#allocation2 + $0x98] sm:$0xff]
    %v294 = vld [vmem:[#allocation2 + $0xa0] sm:$0xff]
    %v295 = vld [vmem:[#allocation2 + $0xa8] sm:$0xff]
    %v296 = vld [vmem:[#allocation2 + $0xb0] sm:$0xff]
    %v297 = vld [vmem:[#allocation2 + $0xb8] sm:$0xff]
    %v298 = vld [vmem:[#allocation2 + $0xc0] sm:$0xff]
    %v299 = vld [vmem:[#allocation2 + $0xc8] sm:$0xff]
    %v300 = vld [vmem:[#allocation2 + $0xd0] sm:$0xff]
    %v301 = vld [vmem:[#allocation2 + $0xd8] sm:$0xff]
    %v302 = vld [vmem:[#allocation2 + $0xe0] sm:$0xff]
    %v303 = vld [vmem:[#allocation2 + $0xe8] sm:$0xff]
    %v304 = vld [vmem:[#allocation2 + $0xf0] sm:$0xff]
    %v305 = vld [vmem:[#allocation2 + $0xf8] sm:$0xff]
    %v306 = vld [vmem:[%s2] sm:$0x1]
    %v308 = vlaneseq
    %v309 = vshrl.u32 %v308, 7
    %v310 = vsub.s32 0, %v309
    %v311 = vrot.slane %v306, %v310
    %313 = vmatprep.subr.mxu0 0.0
    %314 = vmatpush1.msra.mxu0 %v289
    %315 = vmatprep.subr.mxu0 0.0
    %316 = vmatpush1.msra.mxu0 %v288
    %317 = vmatprep.subr.mxu0 0.0
    %318 = vmatpush1.msra.mxu0 %v287
    %319 = vmatprep.subr.mxu0 0.0
    %320 = vmatpush1.msra.mxu0 %v286
    %321 = vmatprep.subr.mxu0 0.0
    %322 = vmatpush1.msra.mxu0 %v285
    %323 = vmatprep.subr.mxu0 0.0
    %324 = vmatpush1.msra.mxu0 %v284
    %325 = vmatprep.subr.mxu0 0.0
    %326 = vmatpush1.msra.mxu0 %v283
    %327 = vmatprep.subr.mxu0 0.0
    %328 = vmatpush1.msra.mxu0 %v282
    %329 = vmatprep.subr.mxu0 0.0
    %330 = vmatpush1.msra.mxu0 %v281
    %331 = vmatprep.subr.mxu0 0.0
    %332 = vmatpush1.msra.mxu0 %v280
    %333 = vmatprep.subr.mxu0 0.0
    %334 = vmatpush1.msra.mxu0 %v279
    %335 = vmatprep.subr.mxu0 0.0
    %336 = vmatpush1.msra.mxu0 %v278
    %337 = vmatprep.subr.mxu0 0.0
    %338 = vmatpush1.msra.mxu0 %v277
    %339 = vmatprep.subr.mxu0 0.0
    %340 = vmatpush1.msra.mxu0 %v276
    %341 = vmatprep.subr.mxu0 0.0
    %342 = vmatpush1.msra.mxu0 %v275
    %343 = vmatprep.subr.mxu0 0.0
    %344 = vmatpush1.msra.mxu0 %v274
    %345 = vmatprep.subr.mxu0 0.0
    %346 = vmatpush2.msra.mxu0 %v305
    %347 = vmatprep.subr.mxu0 0.0
    %348 = vmatpush2.msra.mxu0 %v304
    %349 = vmatprep.subr.mxu0 0.0
    %350 = vmatpush2.msra.mxu0 %v303
    %351 = vmatprep.subr.mxu0 0.0
    %352 = vmatpush2.msra.mxu0 %v302
    %353 = vmatprep.subr.mxu0 0.0
    %354 = vmatpush2.msra.mxu0 %v301
    %355 = vmatprep.subr.mxu0 0.0
    %356 = vmatpush2.msra.mxu0 %v300
    %357 = vmatprep.subr.mxu0 0.0
    %358 = vmatpush2.msra.mxu0 %v299
    %359 = vmatprep.subr.mxu0 0.0
    %360 = vmatpush2.msra.mxu0 %v298
    %361 = vmatprep.subr.mxu0 0.0
    %362 = vmatpush2.msra.mxu0 %v297
    %363 = vmatprep.subr.mxu0 0.0
    %364 = vmatpush2.msra.mxu0 %v296
    %365 = vmatprep.subr.mxu0 0.0
    %366 = vmatpush2.msra.mxu0 %v295
    %367 = vmatprep.subr.mxu0 0.0
    %368 = vmatpush2.msra.mxu0 %v294
    %369 = vmatprep.subr.mxu0 0.0
    %370 = vmatpush2.msra.mxu0 %v293
    %371 = vmatprep.subr.mxu0 0.0
    %372 = vmatpush2.msra.mxu0 %v292
    %373 = vmatprep.subr.mxu0 0.0
    %374 = vmatpush2.msra.mxu0 %v291
    %375 = vmatprep.subr.mxu0 0.0
    %376 = vmatpush2.msra.mxu0 %v290
    %377 = vmatprep.mubr.f32.mxu0 %v267
    %378 = vmatmul.mubr.f32.gmra.mxu0 %v266
    %v379 = vpop.f32.mrf.mxu0
    %v380 = vadd.f32 %v311, %v379
    %v381 = vpop.f32.mrf.mxu0
    %382 = vmatprep.mubr.f32.mxu0 %v269
    %383 = vmatmul.mubr.f32.gmra.mxu0 %v268
    %v384 = vpop.f32.mrf.mxu0
    %v385 = vadd.f32 %v311, %v384
    %v386 = vpop.f32.mrf.mxu0
    %387 = vmatprep.mubr.f32.mxu0 %v271
    %388 = vmatmul.mubr.f32.gmra.mxu0 %v270
    %v389 = vpop.f32.mrf.mxu0
    %v390 = vadd.f32 %v311, %v389
    %v391 = vpop.f32.mrf.mxu0
    %392 = vmatprep.mubr.f32.mxu0 %v273
    %393 = vmatmul.mubr.f32.gmra.mxu0 %v272
    %v394 = vpop.f32.mrf.mxu0
    %v395 = vadd.f32 %v311, %v394
    %v396 = vpop.f32.mrf.mxu0
    %397 = vdwg.mxu0
    %v398 = vmax.f32 %v380, 0.0
    %v399 = vmax.f32 %v385, 0.0
    %v400 = vmax.f32 %v390, 0.0
    %v401 = vmax.f32 %v395, 0.0
    %v402 = vld [vmem:[%s3] sm:$0xff]
    %v403 = vld [vmem:[%s3 + $0x8] sm:$0xff]
    %v404 = vld [vmem:[%s3 + $0x10] sm:$0xff]
    %v405 = vld [vmem:[%s3 + $0x18] sm:$0xff]
    %v406 = vmul.f32 %v398, %v402
    %v407 = vmul.f32 %v399, %v403
    %v408 = vmul.f32 %v400, %v404
    %v409 = vmul.f32 %v401, %v405
    %v410 = vmax.f32 %v406, %v407
    %v411 = vrot.slane %v410, 4
    %v412 = vmax.f32 %v410, %v411
    %v413 = vrot.slane %v412, 2
    %v414 = vmax.f32 %v412, %v413
    %v415 = vrot.slane %v414, 1
    %v416 = vmax.f32 %v414, %v415
    %v417 = vmax.f32 %v408, %v409
    %v418 = vrot.slane %v417, 4
    %v419 = vmax.f32 %v417, %v418
    %v420 = vrot.slane %v419, 2
    %v421 = vmax.f32 %v419, %v420
    %v422 = vrot.slane %v421, 1
    %v423 = vmax.f32 %v421, %v422
    %vm426 = vcmask 1041409
    %v427 = vsel %vm426, %v423, %v416
    %429 = vst [vmem:[#allocation8] sm:$0x3] %v427
    %v430 = vld [vmem:[#allocation5] sm:$0xff]
    %v431 = vld [vmem:[#allocation5 + $0x8] sm:$0xff]
    %v432 = vld [vmem:[#allocation5 + $0x10] sm:$0xff]
    %v433 = vld [vmem:[#allocation5 + $0x18] sm:$0xff]
    %v434 = vld [vmem:[#allocation5 + $0x20] sm:$0xff]
    %v435 = vld [vmem:[#allocation5 + $0x28] sm:$0xff]
    %v436 = vld [vmem:[#allocation5 + $0x30] sm:$0xff]
    %v437 = vld [vmem:[#allocation5 + $0x38] sm:$0xff]
    %v438 = vld [vmem:[#allocation5 + $0x40] sm:$0xff]
    %v439 = vld [vmem:[#allocation5 + $0x48] sm:$0xff]
    %v440 = vld [vmem:[#allocation5 + $0x50] sm:$0xff]
    %v441 = vld [vmem:[#allocation5 + $0x58] sm:$0xff]
    %v442 = vld [vmem:[#allocation5 + $0x60] sm:$0xff]
    %v443 = vld [vmem:[#allocation5 + $0x68] sm:$0xff]
    %v444 = vld [vmem:[#allocation5 + $0x70] sm:$0xff]
    %v445 = vld [vmem:[#allocation5 + $0x78] sm:$0xff]
    %v446 = vld [vmem:[%s5] sm:$0x1]
    %v448 = vlaneseq
    %v449 = vshrl.u32 %v448, 7
    %v450 = vsub.s32 0, %v449
    %v451 = vrot.slane %v446, %v450
    %453 = vmatprep.subr.mxu0 0.0
    %454 = vmatpush1.msra.mxu0 %v445
    %455 = vmatprep.subr.mxu0 0.0
    %456 = vmatpush1.msra.mxu0 %v444
    %457 = vmatprep.subr.mxu0 0.0
    %458 = vmatpush1.msra.mxu0 %v443
    %459 = vmatprep.subr.mxu0 0.0
    %460 = vmatpush1.msra.mxu0 %v442
    %461 = vmatprep.subr.mxu0 0.0
    %462 = vmatpush1.msra.mxu0 %v441
    %463 = vmatprep.subr.mxu0 0.0
    %464 = vmatpush1.msra.mxu0 %v440
    %465 = vmatprep.subr.mxu0 0.0
    %466 = vmatpush1.msra.mxu0 %v439
    %467 = vmatprep.subr.mxu0 0.0
    %468 = vmatpush1.msra.mxu0 %v438
    %469 = vmatprep.subr.mxu0 0.0
    %470 = vmatpush1.msra.mxu0 %v437
    %471 = vmatprep.subr.mxu0 0.0
    %472 = vmatpush1.msra.mxu0 %v436
    %473 = vmatprep.subr.mxu0 0.0
    %474 = vmatpush1.msra.mxu0 %v435
    %475 = vmatprep.subr.mxu0 0.0
    %476 = vmatpush1.msra.mxu0 %v434
    %477 = vmatprep.subr.mxu0 0.0
    %478 = vmatpush1.msra.mxu0 %v433
    %479 = vmatprep.subr.mxu0 0.0
    %480 = vmatpush1.msra.mxu0 %v432
    %481 = vmatprep.subr.mxu0 0.0
    %482 = vmatpush1.msra.mxu0 %v431
    %483 = vmatprep.subr.mxu0 0.0
    %484 = vmatpush1.msra.mxu0 %v430
    %485 = vmatprep.subr.mxu0 0.0
    %486 = vmatpush2.msra.mxu0 0.0
    %487 = vmatprep.subr.mxu0 0.0
    %488 = vmatpush2.msra.mxu0 0.0
    %489 = vmatprep.subr.mxu0 0.0
    %490 = vmatpush2.msra.mxu0 0.0
    %491 = vmatprep.subr.mxu0 0.0
    %492 = vmatpush2.msra.mxu0 0.0
    %493 = vmatprep.subr.mxu0 0.0
    %494 = vmatpush2.msra.mxu0 0.0
    %495 = vmatprep.subr.mxu0 0.0
    %496 = vmatpush2.msra.mxu0 0.0
    %497 = vmatprep.subr.mxu0 0.0
    %498 = vmatpush2.msra.mxu0 0.0
    %499 = vmatprep.subr.mxu0 0.0
    %500 = vmatpush2.msra.mxu0 0.0
    %501 = vmatprep.subr.mxu0 0.0
    %502 = vmatpush2.msra.mxu0 0.0
    %503 = vmatprep.subr.mxu0 0.0
    %504 = vmatpush2.msra.mxu0 0.0
    %505 = vmatprep.subr.mxu0 0.0
    %506 = vmatpush2.msra.mxu0 0.0
    %507 = vmatprep.subr.mxu0 0.0
    %508 = vmatpush2.msra.mxu0 0.0
    %509 = vmatprep.subr.mxu0 0.0
    %510 = vmatpush2.msra.mxu0 0.0
    %511 = vmatprep.subr.mxu0 0.0
    %512 = vmatpush2.msra.mxu0 0.0
    %513 = vmatprep.subr.mxu0 0.0
    %514 = vmatpush2.msra.mxu0 0.0
    %515 = vmatprep.subr.mxu0 0.0
    %516 = vmatpush2.msra.mxu0 0.0
    %517 = vmatprep.mubr.f32.mxu0 0.0
    %518 = vmatmul.mubr.f32.gmra.mxu0 %v427
    %v519 = vpop.f32.mrf.mxu0
    %v520 = vadd.f32 %v451, %v519
    %v521 = vpop.f32.mrf.mxu0
    %522 = vdwg.mxu0
    %vm523 = vcmask 1041408
    %v524 = vsel %vm523, %v520, -inf
    %525 = vmax.xlane.f32.xlu0 %v524
    %v526 = vpop.xlane.xlu0 %525
    %v527 = vsub.f32 %v520, %v526
    %v528 = vmul.f32 %v527, 1.442695
    %v529 = vpow.pop %v528
    %v530 = vsel %vm523, %v529, 0.0
    %531 = vadd.xlane.f32.xlu0 %v530
    %v532 = vpop.xlane.xlu0 %531
    %v533 = vrcp.pop %v532
    %v534 = vmul.f32 %v529, %v533
    %535 = vst [vmem:[#allocation7] sm:$0x3] %v534
    // Predicated region
    $region34: #{_forward_impl.1} parent=1 // pred_check
      _
    $region35: #{_forward_impl.1} parent=1 // pred_check_branch
      %537 = sbr.rel (0) target = $region37
    $region36: #{_forward_impl.1} parent=1 // pred_region
      %s539 = ssub.s32 32, 32
      %540 = vsyncadd [#allocation4], %s539
      %s542 = sshll.u32 [#allocation7], 4
      %s543 = int_to_ptr.vmem [resolvable:$true] %s542
      %545 = dma.vmem_to_hbm [thread:$0]  %s543, 32, %s6, [#allocation4]
    $region37: #{_forward_impl.1} parent=1 // pred_fallthru
      _
    // Predicated region
    $region38: #{_forward_impl.1} parent=1 // pred_check
      _
    $region39: #{_forward_impl.1} parent=1 // pred_check_branch
      %547 = sbr.rel (0) target = $region41
    $region40: #{_forward_impl.1} parent=1 // pred_region
      %s549 = ssub.s32 32, 32
      %550 = vsyncadd [#allocation9], %s549
      %s552 = sshll.u32 [#allocation8], 4
      %s553 = int_to_ptr.vmem [resolvable:$true] %s552
      %555 = dma.vmem_to_hbm [thread:$0]  %s553, 32, %s7, [#allocation9]
    $region41: #{_forward_impl.1} parent=1 // pred_fallthru
      _
    // Predicated region
    $region42: #{_forward_impl.1} parent=1 // pred_check
      _
    $region43: #{_forward_impl.1} parent=1 // pred_check_branch
      %557 = sbr.rel (0) target = $region45
    $region44: #{_forward_impl.1} parent=1 // pred_region
      %558 = dma.done [#allocation4], 32
    $region45: #{_forward_impl.1} parent=1 // pred_fallthru
      _
    // Predicated region
    $region46: #{_forward_impl.1} parent=1 // pred_check
      _
    $region47: #{_forward_impl.1} parent=1 // pred_check_branch
      %560 = sbr.rel (0) target = $region49
    $region48: #{_forward_impl.1} parent=1 // pred_region
      %561 = dma.done [#allocation9], 32
    $region49: #{_forward_impl.1} parent=1 // pred_fallthru
      _
    %562 = vsyncpa [#allocation3], 1
    %563 = vsyncpa [#allocation6], 1
    %564 = vsyncpa [#allocation4], 1
    %565 = vsyncpa [#allocation9], 1

</llo_original>
